<compile_context>
chip_gen: v5e
topology: v5e:2x2
jax: 0.10.0
libtpu: 0.0.40
codegen_flags: <defaults>
</compile_context>

<pallas_src>
import jax
import jax.numpy as jnp
import numpy as np
from jax.experimental import pallas as pl
from jax.experimental.pallas import tpu as pltpu

LN_EPS = 1e-5  # torch.nn.LayerNorm default


def _critic_kernel(state_ref, action_ref, w1s_ref, w1a_ref, vecs_ref,
                   w2_ref, wh_ref, out_ref):
    n_features = w2_ref.shape[0]
    n_head_out = out_ref.shape[-1]

    # Packed small vectors: row 0=b1, 1=ln_gamma, 2=ln_beta, 3=b2, 4=bh(padded)
    vecs = vecs_ref[...]
    b1 = vecs[0:1, :n_features]
    ln_g = vecs[1:2, :n_features]
    ln_b = vecs[2:3, :n_features]
    b2 = vecs[3:4, :n_features]
    bh = vecs[4:5, :n_head_out]

    s = state_ref[...].astype(jnp.float32)   # torch .float()
    a = action_ref[...].astype(jnp.float32)

    # _h1 on concat([state, action]) fused as two dots into one accumulator.
    h1 = (jnp.dot(s, w1s_ref[...], preferred_element_type=jnp.float32)
          + jnp.dot(a, w1a_ref[...], preferred_element_type=jnp.float32)
          + b1)

    # LayerNorm over the feature (lane) axis, affine, f32.
    mean = jnp.mean(h1, axis=-1, keepdims=True)
    centered = h1 - mean
    var = jnp.mean(centered * centered, axis=-1, keepdims=True)
    f1 = jnp.maximum(centered * jax.lax.rsqrt(var + LN_EPS) * ln_g + ln_b, 0.0)

    # _h2: Linear + relu
    f2 = jnp.maximum(
        jnp.dot(f1, w2_ref[...], preferred_element_type=jnp.float32) + b2, 0.0)

    # 10 heads fused as one Linear(n_features -> 10*n_output).
    q = jnp.dot(f2, wh_ref[...], preferred_element_type=jnp.float32) + bh
    out_ref[...] = q.astype(out_ref.dtype)


def _pick_batch_tile(batch):
    # Whole batch as one tile for small B; cap the tile for very large B so
    # double-buffered activations stay well under the v7x 32 MiB scoped VMEM.
    if batch <= 512:
        return batch
    return 256


def multi_head_critic_forward(state, action, params):
    """Fused forward. Wrapper contains no compute ops (squeeze is metadata-only)."""
    B = state.shape[0]
    sd = state.shape[1]
    ad = action.shape[1]
    n_features = params["w2"].shape[0]
    n_head_out = params["wh"].shape[1]
    vec_w = params["vecs"].shape[1]

    tb = _pick_batch_tile(B)
    grid = (pl.cdiv(B, tb),)

    batch_spec = lambda cols: pl.BlockSpec((tb, cols), lambda i: (i, 0))
    resident = lambda shape: pl.BlockSpec(shape, lambda i: (0, 0))

    q = pl.pallas_call(
        _critic_kernel,
        out_shape=jax.ShapeDtypeStruct((B, n_head_out), jnp.float32),
        grid=grid,
        in_specs=[
            batch_spec(sd),                       # state  (tiled on batch)
            batch_spec(ad),                       # action (tiled on batch)
            resident((sd, n_features)),           # W1[:sd]   (resident)
            resident((ad, n_features)),           # W1[sd:]   (resident)
            resident((5, vec_w)),                 # packed b1/ln_g/ln_b/b2/bh
            resident((n_features, n_features)),   # W2
            resident((n_features, n_head_out)),   # fused head weights
        ],
        out_specs=batch_spec(n_head_out),
        compiler_params=pltpu.CompilerParams(
            dimension_semantics=("parallel",)),
    )(state, action, params["w1s"], params["w1a"], params["vecs"],
      params["w2"], params["wh"])

    # torch.squeeze(q): drops all size-1 dims (no-op / metadata-only otherwise).
    return jnp.squeeze(q)


def _xavier_uniform(key, fan_in, fan_out, gain):
    limit = gain * jnp.sqrt(6.0 / (fan_in + fan_out))
    # Stored as (in, out) so the kernel computes x @ W.
    return jax.random.uniform(key, (fan_in, fan_out), jnp.float32, -limit, limit)


def init_params(key, state_dim, action_dim, n_features, n_output, n_heads=10):
    n_input = state_dim + action_dim
    relu_gain = jnp.sqrt(2.0)   # nn.init.calculate_gain('relu')
    lin_gain = 1.0              # nn.init.calculate_gain('linear')
    keys = jax.random.split(key, 3 + n_heads)

    # Xavier init over the FULL (n_input, n_features) matrix (matches torch),
    # then split by rows so the kernel can fuse the concat into two dots.
    w1 = _xavier_uniform(keys[0], n_input, n_features, relu_gain)
    w1s, w1a = w1[:state_dim], w1[state_dim:]

    w2 = _xavier_uniform(keys[1], n_features, n_features, relu_gain)

    # Fuse the 10 head Linears into one (n_features, n_heads*n_output) matrix;
    # column order matches torch.cat((q0,...,q9), dim=-1).
    head_ws = [_xavier_uniform(keys[2 + i], n_features, n_output, lin_gain)
               for i in range(n_heads)]
    wh = jnp.concatenate(head_ws, axis=1)

    n_head_out = n_heads * n_output
    vec_w = max(n_features, n_head_out)

    def _pad(v):
        return jnp.pad(v, (0, vec_w - v.shape[0]))

    # Pack all tiny vectors into a single (5, vec_w) array (one DMA).
    vecs = jnp.stack([
        _pad(jnp.zeros((n_features,), jnp.float32)),   # b1
        _pad(jnp.ones((n_features,), jnp.float32)),    # LayerNorm gamma
        _pad(jnp.zeros((n_features,), jnp.float32)),   # LayerNorm beta
        _pad(jnp.zeros((n_features,), jnp.float32)),   # b2
        _pad(jnp.zeros((n_head_out,), jnp.float32)),   # bh (fused head biases)
    ])

    return {"w1s": w1s, "w1a": w1a, "w2": w2, "wh": wh, "vecs": vecs}


def _reference_forward(state, action, params):
    """Pure-JAX reference for correctness checking."""
    sa = jnp.concatenate([state.astype(jnp.float32),
                          action.astype(jnp.float32)], axis=1)
    w1 = jnp.concatenate([params["w1s"], params["w1a"]], axis=0)
    n_features = params["w2"].shape[0]
    n_head_out = params["wh"].shape[1]
    vecs = params["vecs"]
    b1, ln_g, ln_b, b2 = (vecs[0, :n_features], vecs[1, :n_features],
                          vecs[2, :n_features], vecs[3, :n_features])
    bh = vecs[4, :n_head_out]

    h1 = sa @ w1 + b1
    mean = jnp.mean(h1, axis=-1, keepdims=True)
    var = jnp.mean((h1 - mean) ** 2, axis=-1, keepdims=True)
    f1 = jax.nn.relu((h1 - mean) * jax.lax.rsqrt(var + LN_EPS) * ln_g + ln_b)
    f2 = jax.nn.relu(f1 @ params["w2"] + b2)
    return jnp.squeeze(f2 @ params["wh"] + bh)


if __name__ == "__main__":
    key = jax.random.PRNGKey(0)
    k_state, k_action, k_params = jax.random.split(key, 3)

    batch = 8
    state_dim, action_dim = 6, 2          # n_input = input_shape[-1] = 8
    n_features = 32
    n_output = 1                           # output_shape[0]

    state = jax.random.normal(k_state, (batch, state_dim), jnp.float32)
    action = jax.random.normal(k_action, (batch, action_dim), jnp.float32)

    params = init_params(k_params, state_dim, action_dim, n_features, n_output)

    q = multi_head_critic_forward(state, action, params)
    jax.block_until_ready(q)

    assert q.shape == (batch, 10), q.shape

    q_ref = _reference_forward(state, action, params)
    np.testing.assert_allclose(np.asarray(q), np.asarray(q_ref),
                               rtol=1e-5, atol=1e-5)

    print("KERNEL_OK")
</pallas_src>

<mosaic_0001>
module attributes {stable_mosaic.version = 11 : i64} {
  func.func @_critic_kernel(%arg0: i32, %arg1: memref<8x6xf32, #tpu.memory_space<vmem>>, %arg2: memref<8x2xf32, #tpu.memory_space<vmem>>, %arg3: memref<6x32xf32, #tpu.memory_space<vmem>>, %arg4: memref<2x32xf32, #tpu.memory_space<vmem>>, %arg5: memref<5x32xf32, #tpu.memory_space<vmem>>, %arg6: memref<32x32xf32, #tpu.memory_space<vmem>>, %arg7: memref<32x10xf32, #tpu.memory_space<vmem>>, %arg8: memref<8x10xf32, #tpu.memory_space<vmem>>) attributes {dimension_semantics = [#tpu.dimension_semantics<parallel>], iteration_bounds = array<i64: 1>, scalar_prefetch = 0 : i64, scratch_operands = 0 : i64, tpu.core_type = #tpu.core_type<tc>, window_params = [{transform_indices = @transform_0, window_bounds = array<i64: 8, 6>}, {transform_indices = @transform_1, window_bounds = array<i64: 8, 2>}, {pipeline_mode = #tpu.pipeline_mode<synchronous>, transform_indices = @transform_2, window_bounds = array<i64: 6, 32>}, {pipeline_mode = #tpu.pipeline_mode<synchronous>, transform_indices = @transform_3, window_bounds = array<i64: 2, 32>}, {pipeline_mode = #tpu.pipeline_mode<synchronous>, transform_indices = @transform_4, window_bounds = array<i64: 5, 32>}, {pipeline_mode = #tpu.pipeline_mode<synchronous>, transform_indices = @transform_5, window_bounds = array<i64: 32, 32>}, {pipeline_mode = #tpu.pipeline_mode<synchronous>, transform_indices = @transform_6, window_bounds = array<i64: 32, 10>}, {transform_indices = @transform_7, window_bounds = array<i64: 8, 10>}]} {
    %c0 = arith.constant 0 : index
    %c0_0 = arith.constant 0 : index
    %0 = vector.load %arg5[%c0, %c0_0] : memref<5x32xf32, #tpu.memory_space<vmem>>, vector<5x32xf32>
    %1 = vector.extract_strided_slice %0 {offsets = [0, 0], sizes = [1, 32], strides = [1, 1]} : vector<5x32xf32> to vector<1x32xf32>
    %2 = vector.extract_strided_slice %0 {offsets = [1, 0], sizes = [1, 32], strides = [1, 1]} : vector<5x32xf32> to vector<1x32xf32>
    %3 = vector.extract_strided_slice %0 {offsets = [2, 0], sizes = [1, 32], strides = [1, 1]} : vector<5x32xf32> to vector<1x32xf32>
    %4 = vector.extract_strided_slice %0 {offsets = [3, 0], sizes = [1, 32], strides = [1, 1]} : vector<5x32xf32> to vector<1x32xf32>
    %5 = vector.extract_strided_slice %0 {offsets = [4, 0], sizes = [1, 10], strides = [1, 1]} : vector<5x32xf32> to vector<1x10xf32>
    %c0_1 = arith.constant 0 : index
    %c0_2 = arith.constant 0 : index
    %6 = vector.load %arg1[%c0_1, %c0_2] : memref<8x6xf32, #tpu.memory_space<vmem>>, vector<8x6xf32>
    %c0_3 = arith.constant 0 : index
    %c0_4 = arith.constant 0 : index
    %7 = vector.load %arg2[%c0_3, %c0_4] : memref<8x2xf32, #tpu.memory_space<vmem>>, vector<8x2xf32>
    %c0_5 = arith.constant 0 : index
    %c0_6 = arith.constant 0 : index
    %8 = vector.load %arg3[%c0_5, %c0_6] : memref<6x32xf32, #tpu.memory_space<vmem>>, vector<6x32xf32>
    %cst = arith.constant dense<0.000000e+00> : vector<8x32xf32>
    %9 = tpu.matmul %6, %8, %cst {dimension_numbers = #tpu.dot_dimension_numbers<[1], [0], [0], [1], [0, 0, 1, 1], [], []>} : vector<8x6xf32>, vector<6x32xf32>, vector<8x32xf32> -> vector<8x32xf32>
    %c0_7 = arith.constant 0 : index
    %c0_8 = arith.constant 0 : index
    %10 = vector.load %arg4[%c0_7, %c0_8] : memref<2x32xf32, #tpu.memory_space<vmem>>, vector<2x32xf32>
    %cst_9 = arith.constant dense<0.000000e+00> : vector<8x32xf32>
    %11 = tpu.matmul %7, %10, %cst_9 {dimension_numbers = #tpu.dot_dimension_numbers<[1], [0], [0], [1], [0, 0, 1, 1], [], []>} : vector<8x2xf32>, vector<2x32xf32>, vector<8x32xf32> -> vector<8x32xf32>
    %12 = arith.addf %9, %11 : vector<8x32xf32>
    %13 = vector.broadcast %1 : vector<1x32xf32> to vector<8x32xf32>
    %14 = arith.addf %12, %13 : vector<8x32xf32>
    %cst_10 = arith.constant dense<0.000000e+00> : vector<8xf32>
    %15 = vector.multi_reduction <add>, %14, %cst_10 [1] : vector<8x32xf32> to vector<8xf32>
    %16 = vector.shape_cast %15 : vector<8xf32> to vector<8x1xf32>
    %cst_11 = arith.constant 3.200000e+01 : f32
    %17 = vector.broadcast %cst_11 : f32 to vector<8x1xf32>
    %18 = arith.divf %16, %17 : vector<8x1xf32>
    %19 = vector.broadcast %18 : vector<8x1xf32> to vector<8x32xf32>
    %20 = arith.subf %14, %19 : vector<8x32xf32>
    %21 = arith.mulf %20, %20 : vector<8x32xf32>
    %cst_12 = arith.constant dense<0.000000e+00> : vector<8xf32>
    %22 = vector.multi_reduction <add>, %21, %cst_12 [1] : vector<8x32xf32> to vector<8xf32>
    %23 = vector.shape_cast %22 : vector<8xf32> to vector<8x1xf32>
    %cst_13 = arith.constant 3.200000e+01 : f32
    %24 = vector.broadcast %cst_13 : f32 to vector<8x1xf32>
    %25 = arith.divf %23, %24 : vector<8x1xf32>
    %cst_14 = arith.constant 9.99999974E-6 : f32
    %26 = vector.broadcast %cst_14 : f32 to vector<8x1xf32>
    %27 = arith.addf %25, %26 : vector<8x1xf32>
    %28 = math.rsqrt %27 : vector<8x1xf32>
    %29 = vector.broadcast %28 : vector<8x1xf32> to vector<8x32xf32>
    %30 = arith.mulf %20, %29 : vector<8x32xf32>
    %31 = vector.broadcast %2 : vector<1x32xf32> to vector<8x32xf32>
    %32 = arith.mulf %30, %31 : vector<8x32xf32>
    %33 = vector.broadcast %3 : vector<1x32xf32> to vector<8x32xf32>
    %34 = arith.addf %32, %33 : vector<8x32xf32>
    %cst_15 = arith.constant 0.000000e+00 : f32
    %35 = vector.broadcast %cst_15 : f32 to vector<8x32xf32>
    %36 = arith.maximumf %34, %35 : vector<8x32xf32>
    %c0_16 = arith.constant 0 : index
    %c0_17 = arith.constant 0 : index
    %37 = vector.load %arg6[%c0_16, %c0_17] : memref<32x32xf32, #tpu.memory_space<vmem>>, vector<32x32xf32>
    %cst_18 = arith.constant dense<0.000000e+00> : vector<8x32xf32>
    %38 = tpu.matmul %36, %37, %cst_18 {dimension_numbers = #tpu.dot_dimension_numbers<[1], [0], [0], [1], [0, 0, 1, 1], [], []>} : vector<8x32xf32>, vector<32x32xf32>, vector<8x32xf32> -> vector<8x32xf32>
    %39 = vector.broadcast %4 : vector<1x32xf32> to vector<8x32xf32>
    %40 = arith.addf %38, %39 : vector<8x32xf32>
    %cst_19 = arith.constant 0.000000e+00 : f32
    %41 = vector.broadcast %cst_19 : f32 to vector<8x32xf32>
    %42 = arith.maximumf %40, %41 : vector<8x32xf32>
    %c0_20 = arith.constant 0 : index
    %c0_21 = arith.constant 0 : index
    %43 = vector.load %arg7[%c0_20, %c0_21] : memref<32x10xf32, #tpu.memory_space<vmem>>, vector<32x10xf32>
    %cst_22 = arith.constant dense<0.000000e+00> : vector<8x10xf32>
    %44 = tpu.matmul %42, %43, %cst_22 {dimension_numbers = #tpu.dot_dimension_numbers<[1], [0], [0], [1], [0, 0, 1, 1], [], []>} : vector<8x32xf32>, vector<32x10xf32>, vector<8x10xf32> -> vector<8x10xf32>
    %45 = vector.broadcast %5 : vector<1x10xf32> to vector<8x10xf32>
    %46 = arith.addf %44, %45 : vector<8x10xf32>
    %c0_23 = arith.constant 0 : index
    %c0_24 = arith.constant 0 : index
    %47 = vector.load %arg8[%c0_23, %c0_24] : memref<8x10xf32, #tpu.memory_space<vmem>>, vector<8x10xf32>
    tpu.vector_store %arg8[%c0_23, %c0_24], %46 {strides = array<i32>} : memref<8x10xf32, #tpu.memory_space<vmem>>, vector<8x10xf32>,
    return
  }
  func.func @transform_0(%arg0: i32) -> (i32, i32) {
    %c0_i32 = arith.constant 0 : i32
    %c0_i32_0 = arith.constant 0 : i32
    return %arg0, %c0_i32 : i32, i32
  }
  func.func @transform_1(%arg0: i32) -> (i32, i32) {
    %c0_i32 = arith.constant 0 : i32
    %c0_i32_0 = arith.constant 0 : i32
    return %arg0, %c0_i32 : i32, i32
  }
  func.func @transform_2(%arg0: i32) -> (i32, i32) {
    %c0_i32 = arith.constant 0 : i32
    %c0_i32_0 = arith.constant 0 : i32
    %c0_i32_1 = arith.constant 0 : i32
    return %c0_i32, %c0_i32_0 : i32, i32
  }
  func.func @transform_3(%arg0: i32) -> (i32, i32) {
    %c0_i32 = arith.constant 0 : i32
    %c0_i32_0 = arith.constant 0 : i32
    %c0_i32_1 = arith.constant 0 : i32
    return %c0_i32, %c0_i32_0 : i32, i32
  }
  func.func @transform_4(%arg0: i32) -> (i32, i32) {
    %c0_i32 = arith.constant 0 : i32
    %c0_i32_0 = arith.constant 0 : i32
    %c0_i32_1 = arith.constant 0 : i32
    return %c0_i32, %c0_i32_0 : i32, i32
  }
  func.func @transform_5(%arg0: i32) -> (i32, i32) {
    %c0_i32 = arith.constant 0 : i32
    %c0_i32_0 = arith.constant 0 : i32
    %c0_i32_1 = arith.constant 0 : i32
    return %c0_i32, %c0_i32_0 : i32, i32
  }
  func.func @transform_6(%arg0: i32) -> (i32, i32) {
    %c0_i32 = arith.constant 0 : i32
    %c0_i32_0 = arith.constant 0 : i32
    %c0_i32_1 = arith.constant 0 : i32
    return %c0_i32, %c0_i32_0 : i32, i32
  }
  func.func @transform_7(%arg0: i32) -> (i32, i32) {
    %c0_i32 = arith.constant 0 : i32
    %c0_i32_0 = arith.constant 0 : i32
    return %arg0, %c0_i32 : i32, i32
  }
}

</mosaic_0001>

<llo_original>
// kernel: tpu_custom_call.1
$region0: #{tpu_custom_call.1}
  #allocation0 [shape = 'u32[]', space=smem, size = 0x4, offset = 0x4, fixed_abs, tag = 'smem constant byte address 0x4 - core index']
  #allocation1 [shape = 'u32[72,128]{1,0:T(1,128)}', space=vmem, size = 0x9000, scoped, tag = 'internal scratch']
  %s0 = inlined_call_operand.vmem [shape: f32[8,6], index: 0, kind: input, shape index: {}]
  %s1 = inlined_call_operand.vmem [shape: f32[8,2], index: 1, kind: input, shape index: {}]
  %s2 = inlined_call_operand.vmem [shape: f32[6,32], index: 2, kind: input, shape index: {}]
  %s3 = inlined_call_operand.vmem [shape: f32[2,32], index: 3, kind: input, shape index: {}]
  %s4 = inlined_call_operand.vmem [shape: f32[5,32], index: 4, kind: input, shape index: {}]
  %s5 = inlined_call_operand.vmem [shape: f32[32,32], index: 5, kind: input, shape index: {}]
  %s6 = inlined_call_operand.vmem [shape: f32[32,10], index: 6, kind: input, shape index: {}]
  %s7 = inlined_call_operand.hbm [shape: f32[8,10], index: 7, kind: output, shape index: {}]
  %s8 = sld [smem:[#allocation0]]
  $region38: #{tpu_custom_call.1} parent=0
    _
  %s10 = ssub.s32 1, %s8
  %s11 = scalar_select 0, %s10, %s8
  $region1: #{tpu_custom_call.1} parent=0
    #allocation2 [shape = 'u8[4096]{0}', space=vmem, size = 0x1000, scoped, tag = 'output window, operand 0, single buffered']
    #allocation3 [shape = 's32[1]{0}', space=sflag, size = 0x4, scoped, tag = 'scoped memory for tpu_custom_call.1']
    %12 = vsyncpa [#allocation3], 0
    // Predicated region
    $region2: #{tpu_custom_call.1} parent=1 // pred_check
      _
    $region3: #{tpu_custom_call.1} parent=1 // pred_check_branch
      %14 = sbr.rel (0) target = $region5
    $region4: #{tpu_custom_call.1} parent=1 // pred_region
      _
    $region5: #{tpu_custom_call.1} parent=1 // pred_fallthru
      _
    // Predicated region
    $region6: #{tpu_custom_call.1} parent=1 // pred_check
      _
    $region7: #{tpu_custom_call.1} parent=1 // pred_check_branch
      %16 = sbr.rel (0) target = $region9
    $region8: #{tpu_custom_call.1} parent=1 // pred_region
      _
    $region9: #{tpu_custom_call.1} parent=1 // pred_fallthru
      _
    // Predicated region
    $region10: #{tpu_custom_call.1} parent=1 // pred_check
      _
    $region11: #{tpu_custom_call.1} parent=1 // pred_check_branch
      %18 = sbr.rel (0) target = $region13
    $region12: #{tpu_custom_call.1} parent=1 // pred_region
      _
    $region13: #{tpu_custom_call.1} parent=1 // pred_fallthru
      _
    // Predicated region
    $region14: #{tpu_custom_call.1} parent=1 // pred_check
      _
    $region15: #{tpu_custom_call.1} parent=1 // pred_check_branch
      %20 = sbr.rel (0) target = $region17
    $region16: #{tpu_custom_call.1} parent=1 // pred_region
      _
    $region17: #{tpu_custom_call.1} parent=1 // pred_fallthru
      _
    // Predicated region
    $region18: #{tpu_custom_call.1} parent=1 // pred_check
      _
    $region19: #{tpu_custom_call.1} parent=1 // pred_check_branch
      %22 = sbr.rel (0) target = $region21
    $region20: #{tpu_custom_call.1} parent=1 // pred_region
      _
    $region21: #{tpu_custom_call.1} parent=1 // pred_fallthru
      _
    // Predicated region
    $region22: #{tpu_custom_call.1} parent=1 // pred_check
      _
    $region23: #{tpu_custom_call.1} parent=1 // pred_check_branch
      %24 = sbr.rel (0) target = $region25
    $region24: #{tpu_custom_call.1} parent=1 // pred_region
      _
    $region25: #{tpu_custom_call.1} parent=1 // pred_fallthru
      _
    // Predicated region
    $region26: #{tpu_custom_call.1} parent=1 // pred_check
      _
    $region27: #{tpu_custom_call.1} parent=1 // pred_check_branch
      %26 = sbr.rel (0) target = $region29
    $region28: #{tpu_custom_call.1} parent=1 // pred_region
      _
    $region29: #{tpu_custom_call.1} parent=1 // pred_fallthru
      _
    %v27 = vld [vmem:[%s4] sm:$0x1f]
    %v28 = vld [vmem:[%s0] sm:$0xff]
    %v29 = vld [vmem:[%s1] sm:$0xff]
    %v30 = vld [vmem:[%s2] sm:$0x3f]
    %v31 = vld [vmem:[%s3] sm:$0x3]
    %vm32 = vcmask 15360
    %v34 = vsel %vm32, %v29, 0
    %vm36 = vcmask 1041408
    %v38 = vsel %vm36, %v31, 0
    %40 = vmatpush.msra.mxu0 0.0
    %41 = vmatpush.msra.mxu0 0.0
    %42 = vmatpush.msra.mxu0 0.0
    %43 = vmatpush.msra.mxu0 0.0
    %44 = vmatpush.msra.mxu0 0.0
    %45 = vmatpush.msra.mxu0 0.0
    %46 = vmatpush.msra.mxu0 0.0
    %47 = vmatpush.msra.mxu0 0.0
    %48 = vmatpush.msra.mxu0 0.0
    %49 = vmatpush.msra.mxu0 0.0
    %50 = vmatpush.msra.mxu0 0.0
    %51 = vmatpush.msra.mxu0 0.0
    %52 = vmatpush.msra.mxu0 0.0
    %53 = vmatpush.msra.mxu0 0.0
    %54 = vmatpush.msra.mxu0 0.0
    %55 = vmatpush.msra.mxu0 %v38
    %56 = vmatmul.f32.gmra.mxu0 %v34
    %v57 = vpop.f32.mrf.mxu0
    %v58 = vadd.f32 0.0, %v57
    %59 = vdwg.mxu0
    %vm60 = vcmask 48128
    %v62 = vsel %vm60, %v28, 0
    %vm64 = vcmask 1045504
    %v66 = vsel %vm64, %v30, 0
    %68 = vmatpush.msra.mxu0 0.0
    %69 = vmatpush.msra.mxu0 0.0
    %70 = vmatpush.msra.mxu0 0.0
    %71 = vmatpush.msra.mxu0 0.0
    %72 = vmatpush.msra.mxu0 0.0
    %73 = vmatpush.msra.mxu0 0.0
    %74 = vmatpush.msra.mxu0 0.0
    %75 = vmatpush.msra.mxu0 0.0
    %76 = vmatpush.msra.mxu0 0.0
    %77 = vmatpush.msra.mxu0 0.0
    %78 = vmatpush.msra.mxu0 0.0
    %79 = vmatpush.msra.mxu0 0.0
    %80 = vmatpush.msra.mxu0 0.0
    %81 = vmatpush.msra.mxu0 0.0
    %82 = vmatpush.msra.mxu0 0.0
    %83 = vmatpush.msra.mxu0 %v66
    %84 = vmatmul.f32.gmra.mxu0 %v62
    %v85 = vpop.f32.mrf.mxu0
    %v86 = vadd.f32 %v58, %v85
    %87 = vdwg.mxu0
    %v88 = vperm.slane %v27, 0
    %v89 = vadd.f32 %v86, %v88
    %vm90 = vcmask 261120
    %v91 = vsel %vm90, %v89, 0.0
    %92 = vadd.xlane.f32.xlu0 %v91
    %v93 = vpop.xlane.xlu0 %92
    %v94 = vrcp.pop 32.0
    %v95 = vmul.f32 32.0, %v94
    %v96 = vsub.f32 1.0, %v95
    %v97 = vmul.f32 %v94, %v96
    %v98 = vadd.f32 %v94, %v97
    %vm99 = vweird.f32 %v94
    %v100 = vsel %vm99, %v94, %v98
    %v101 = vmul.f32 %v93, %v100
    %v102 = vsub.f32 %v89, %v101
    %v103 = vmul.f32 %v102, %v102
    %v104 = vsel %vm90, %v103, 0.0
    %105 = vadd.xlane.f32.xlu0 %v104
    %v106 = vpop.xlane.xlu0 %105
    %v107 = vmul.f32 %v106, %v100
    %v108 = vadd.f32 %v107, 1e-05
    %v109 = vrsqrt.pop %v108
    %v110 = vmul.f32 %v109, %v108
    %v111 = vmul.f32 %v110, %v109
    %v112 = vmul.f32 0.5, %v111
    %v113 = vsub.f32 1.5, %v112
    %v114 = vmul.f32 %v109, %v113
    %vm115 = vweird.f32 %v108
    %vm116 = vweird.f32 %v109
    %vm117 = vmor %vm115, %vm116
    %v118 = vsel %vm117, %v109, %v114
    %v119 = vmul.f32 %v102, %v118
    %v120 = vperm.slane %v27, 1
    %v121 = vmul.f32 %v119, %v120
    %v122 = vperm.slane %v27, 2
    %v123 = vadd.f32 %v121, %v122
    %v124 = vmax.f32 %v123, 0.0
    %v125 = vld [vmem:[%s5] sm:$0xff]
    %v126 = vld [vmem:[%s5 + $0x8] sm:$0xff]
    %v127 = vld [vmem:[%s5 + $0x10] sm:$0xff]
    %v128 = vld [vmem:[%s5 + $0x18] sm:$0xff]
    %v129 = vperm.slane %v27, 3
    %v131 = vsel %vm90, %v124, 0
    %133 = vmatpush.msra.mxu0 0.0
    %134 = vmatpush.msra.mxu0 0.0
    %135 = vmatpush.msra.mxu0 0.0
    %136 = vmatpush.msra.mxu0 0.0
    %137 = vmatpush.msra.mxu0 0.0
    %138 = vmatpush.msra.mxu0 0.0
    %139 = vmatpush.msra.mxu0 0.0
    %140 = vmatpush.msra.mxu0 0.0
    %141 = vmatpush.msra.mxu0 0.0
    %142 = vmatpush.msra.mxu0 0.0
    %143 = vmatpush.msra.mxu0 0.0
    %144 = vmatpush.msra.mxu0 0.0
    %145 = vmatpush.msra.mxu0 %v128
    %146 = vmatpush.msra.mxu0 %v127
    %147 = vmatpush.msra.mxu0 %v126
    %148 = vmatpush.msra.mxu0 %v125
    %149 = vmatmul.f32.gmra.mxu0 %v131
    %v150 = vpop.f32.mrf.mxu0
    %v151 = vadd.f32 %v129, %v150
    %152 = vdwg.mxu0
    %v153 = vmax.f32 %v151, 0.0
    %v154 = vld [vmem:[%s6] sm:$0xff]
    %v155 = vld [vmem:[%s6 + $0x8] sm:$0xff]
    %v156 = vld [vmem:[%s6 + $0x10] sm:$0xff]
    %v157 = vld [vmem:[%s6 + $0x18] sm:$0xff]
    %v158 = vperm.slane %v27, 4
    %v160 = vsel %vm90, %v153, 0
    %162 = vmatpush.msra.mxu0 0.0
    %163 = vmatpush.msra.mxu0 0.0
    %164 = vmatpush.msra.mxu0 0.0
    %165 = vmatpush.msra.mxu0 0.0
    %166 = vmatpush.msra.mxu0 0.0
    %167 = vmatpush.msra.mxu0 0.0
    %168 = vmatpush.msra.mxu0 0.0
    %169 = vmatpush.msra.mxu0 0.0
    %170 = vmatpush.msra.mxu0 0.0
    %171 = vmatpush.msra.mxu0 0.0
    %172 = vmatpush.msra.mxu0 0.0
    %173 = vmatpush.msra.mxu0 0.0
    %174 = vmatpush.msra.mxu0 %v157
    %175 = vmatpush.msra.mxu0 %v156
    %176 = vmatpush.msra.mxu0 %v155
    %177 = vmatpush.msra.mxu0 %v154
    %178 = vmatmul.f32.gmra.mxu0 %v160
    %v179 = vpop.f32.mrf.mxu0
    %v180 = vadd.f32 %v158, %v179
    %181 = vdwg.mxu0
    %vm182 = vcmask 80896
    %183 = vst.msk [vmem:[#allocation2] sm:$0xff] %vm182, %v180
    // Predicated region
    $region30: #{tpu_custom_call.1} parent=1 // pred_check
      _
    $region31: #{tpu_custom_call.1} parent=1 // pred_check_branch
      %185 = sbr.rel (0) target = $region33
    $region32: #{tpu_custom_call.1} parent=1 // pred_region
      %187 = vsyncadd [#allocation3], 0
      %s189 = sshll.u32 [#allocation2], 4
      %s190 = int_to_ptr.vmem [resolvable:$true] %s189
      %s191 = sshll.u32 %s7, 4
      %s192 = int_to_ptr.hbm [resolvable:$true] %s191
      %194 = dma.vmem_to_hbm [thread:$0]  %s190, 128, %s192, [#allocation3]
    $region33: #{tpu_custom_call.1} parent=1 // pred_fallthru
      _
    // Predicated region
    $region34: #{tpu_custom_call.1} parent=1 // pred_check
      _
    $region35: #{tpu_custom_call.1} parent=1 // pred_check_branch
      %196 = sbr.rel (0) target = $region37
    $region36: #{tpu_custom_call.1} parent=1 // pred_region
      %198 = dma.done [#allocation3], 128
    $region37: #{tpu_custom_call.1} parent=1 // pred_fallthru
      _
    %199 = vsyncpa [#allocation3], 1

</llo_original>
